<compile_context>
chip_gen: v6e
topology: v6e:2x2x1
jax: 0.10.0
libtpu: 0.0.40
codegen_flags: <defaults>
</compile_context>

<pallas_src>
import functools

import jax
import jax.numpy as jnp
from jax.experimental import pallas as pl
from jax.experimental.pallas import tpu as pltpu


LN_EPS = 1e-5
LANE = 128
SUBLANE = 8


def _round_up(x, m):
    return (x + m - 1) // m * m


def _pad2d(a, rows, cols):
    """Zero-pad a 2-D array up to (rows, cols); no-op copy avoided if aligned."""
    pr, pc = rows - a.shape[0], cols - a.shape[1]
    if pr == 0 and pc == 0:
        return a
    return jnp.pad(a, ((0, pr), (0, pc)))


def _layernorm_onepass(h, gamma, beta, inv_n):
    """One-pass LayerNorm over the last axis (f32).

    Padded lanes of h are zero and padded lanes of gamma/beta are zero, so
    summing over all (padded) lanes and dividing by the real feature count
    gives exact statistics, and padded lanes come out exactly zero.
    """
    s1 = jnp.sum(h, axis=-1, keepdims=True)
    s2 = jnp.sum(h * h, axis=-1, keepdims=True)
    mu = s1 * inv_n
    var = s2 * inv_n - mu * mu           # biased variance (matches PyTorch LN)
    inv_std = jax.lax.rsqrt(var + LN_EPS)
    return (h - mu) * inv_std * gamma + beta


def preprocessor_kernel(x_ref, w1_ref, b1_ref, g_ref, be_ref, w2_ref, b2_ref,
                        o_ref, *, hidden_real):
    inv_n = jnp.float32(1.0 / hidden_real)
    gamma = g_ref[...]
    beta = be_ref[...]

    # --- block 1: Linear(in, hidden) + LayerNorm + ReLU + Dropout(eval) ---
    h = jnp.dot(x_ref[...], w1_ref[...], preferred_element_type=jnp.float32)
    h = h + b1_ref[...]
    h = _layernorm_onepass(h, gamma, beta, inv_n)
    h = jnp.maximum(h, 0.0)

    # --- block 2: Linear(hidden, hidden) + LayerNorm + ReLU + Dropout(eval) ---
    h = jnp.dot(h.astype(jnp.bfloat16), w2_ref[...],
                preferred_element_type=jnp.float32)
    h = h + b2_ref[...]
    h = _layernorm_onepass(h, gamma, beta, inv_n)
    h = jnp.maximum(h, 0.0)

    o_ref[...] = h.astype(o_ref.dtype)


def preprocessor_forward(x, params, *, tile_m=256):
    """x: [N, in_channels] float32. Returns [N, hidden] float32."""
    w1, b1, gamma, beta, w2, b2 = params
    N, in_ch = x.shape
    hidden = w1.shape[1]

    in_p = _round_up(in_ch, LANE)
    hid_p = _round_up(hidden, LANE)

    # Row tile: multiple of 8 sublanes, capped so tiny inputs don't blow up
    # into a mostly-padded tile; rows padded to a tile multiple (ragged N).
    tile_m = max(SUBLANE, _round_up(tile_m, SUBLANE))
    tile_m = min(tile_m, _round_up(N, SUBLANE))
    n_p = _round_up(N, tile_m)

    # Zero-pad features to 128-lane multiples (lane-dense loads/stores, exact
    # LN stats) and rows to a tile_m multiple.  bf16 operands for the MXU;
    # small biases / LN params stay f32.
    x_p = _pad2d(x.astype(jnp.bfloat16), n_p, in_p)
    w1_p = _pad2d(w1.astype(jnp.bfloat16), in_p, hid_p)
    w2_p = _pad2d(w2.astype(jnp.bfloat16), hid_p, hid_p)
    b1_p = _pad2d(b1, 1, hid_p)
    b2_p = _pad2d(b2, 1, hid_p)
    g_p = _pad2d(gamma, 1, hid_p)    # padded lanes = 0
    be_p = _pad2d(beta, 1, hid_p)    # padded lanes = 0

    grid = (n_p // tile_m,)

    def full(shape):
        # Grid-invariant full block (index_map always block 0) -> fetched once,
        # kept resident in VMEM across the whole row grid.
        return pl.BlockSpec(shape, lambda i: tuple(0 for _ in shape))

    cost = pl.CostEstimate(
        flops=2 * N * hidden * (in_ch + hidden) + 10 * N * hidden,
        transcendentals=2 * N,                       # one rsqrt per row per LN
        bytes_accessed=(x_p.nbytes + w1_p.nbytes + w2_p.nbytes
                        + b1_p.nbytes + b2_p.nbytes + g_p.nbytes + be_p.nbytes
                        + n_p * hid_p * 4),
    )

    out = pl.pallas_call(
        functools.partial(preprocessor_kernel, hidden_real=hidden),
        out_shape=jax.ShapeDtypeStruct((n_p, hid_p), jnp.float32),
        grid_spec=pltpu.PrefetchScalarGridSpec(
            num_scalar_prefetch=0,
            grid=grid,
            in_specs=[
                pl.BlockSpec((tile_m, in_p), lambda i: (i, 0)),  # x row tile
                full((in_p, hid_p)),                             # W1 (bf16)
                full((1, hid_p)),                                # b1
                full((1, hid_p)),                                # gamma (shared LN)
                full((1, hid_p)),                                # beta  (shared LN)
                full((hid_p, hid_p)),                            # W2 (bf16)
                full((1, hid_p)),                                # b2
            ],
            out_specs=pl.BlockSpec((tile_m, hid_p), lambda i: (i, 0)),
        ),
        compiler_params=pltpu.CompilerParams(
            dimension_semantics=("parallel",)),
        cost_estimate=cost,
    )(x_p, w1_p, b1_p, g_p, be_p, w2_p, b2_p)

    # Strip row / lane padding.
    return out[:N, :hidden]


def init_params(key, in_channels, hidden_channels):
    """Deterministic synthetic init matching the module's parameter shapes."""
    k1, k2, k3, k4 = jax.random.split(key, 4)
    # Linear weights stored as [in, out] (transpose of PyTorch's [out, in]).
    w1 = jax.random.normal(k1, (in_channels, hidden_channels), jnp.float32) * 0.1
    b1 = jax.random.normal(k2, (1, hidden_channels), jnp.float32) * 0.01
    w2 = jax.random.normal(k3, (hidden_channels, hidden_channels), jnp.float32) * 0.1
    b2 = jax.random.normal(k4, (1, hidden_channels), jnp.float32) * 0.01
    # Shared LayerNorm: default init gamma=1, beta=0.
    gamma = jnp.ones((1, hidden_channels), jnp.float32)
    beta = jnp.zeros((1, hidden_channels), jnp.float32)
    return (w1, b1, gamma, beta, w2, b2)


def reference_forward(x, params):
    """Pure-JAX f32 reference for correctness checking."""
    w1, b1, gamma, beta, w2, b2 = params

    def ln(h):
        mu = jnp.mean(h, axis=-1, keepdims=True)
        var = jnp.mean((h - mu) ** 2, axis=-1, keepdims=True)
        return (h - mu) / jnp.sqrt(var + LN_EPS) * gamma + beta

    h = jnp.maximum(ln(x @ w1 + b1), 0.0)
    h = jnp.maximum(ln(h @ w2 + b2), 0.0)
    return h


if __name__ == "__main__":
    key = jax.random.PRNGKey(0)
    kx, kp = jax.random.split(key)

    # Small demo shapes; N deliberately NOT a multiple of the tile to exercise
    # the ragged-N padding path.
    N, in_channels, hidden_channels = 300, 16, 32
    x = jax.random.normal(kx, (N, in_channels), jnp.float32)
    params = init_params(kp, in_channels, hidden_channels)

    out = preprocessor_forward(x, params, tile_m=128)
    out = jax.block_until_ready(out)

    ref = reference_forward(x, params)
    assert out.shape == (N, hidden_channels)
    # bf16 MXU operands (f32 accumulation) => relaxed tolerance vs f32 reference.
    assert jnp.allclose(out, ref, atol=5e-2, rtol=5e-2), (
        "mismatch vs reference: max abs diff = "
        f"{float(jnp.max(jnp.abs(out - ref)))}")

    print("KERNEL_OK")
</pallas_src>

<mosaic_0001>
module attributes {stable_mosaic.version = 11 : i64} {
  func.func @preprocessor_kernel(%arg0: i32, %arg1: memref<128x128xbf16, #tpu.memory_space<vmem>>, %arg2: memref<128x128xbf16, #tpu.memory_space<vmem>>, %arg3: memref<1x128xf32, #tpu.memory_space<vmem>>, %arg4: memref<1x128xf32, #tpu.memory_space<vmem>>, %arg5: memref<1x128xf32, #tpu.memory_space<vmem>>, %arg6: memref<128x128xbf16, #tpu.memory_space<vmem>>, %arg7: memref<1x128xf32, #tpu.memory_space<vmem>>, %arg8: memref<128x128xf32, #tpu.memory_space<vmem>>) attributes {dimension_semantics = [#tpu.dimension_semantics<parallel>], iteration_bounds = array<i64: 3>, scalar_prefetch = 0 : i64, scratch_operands = 0 : i64, tpu.core_type = #tpu.core_type<tc>, window_params = [{transform_indices = @transform_0, window_bounds = array<i64: 128, 128>}, {pipeline_mode = #tpu.pipeline_mode<synchronous>, transform_indices = @transform_1, window_bounds = array<i64: 128, 128>}, {pipeline_mode = #tpu.pipeline_mode<synchronous>, transform_indices = @transform_2, window_bounds = array<i64: 1, 128>}, {pipeline_mode = #tpu.pipeline_mode<synchronous>, transform_indices = @transform_3, window_bounds = array<i64: 1, 128>}, {pipeline_mode = #tpu.pipeline_mode<synchronous>, transform_indices = @transform_4, window_bounds = array<i64: 1, 128>}, {pipeline_mode = #tpu.pipeline_mode<synchronous>, transform_indices = @transform_5, window_bounds = array<i64: 128, 128>}, {pipeline_mode = #tpu.pipeline_mode<synchronous>, transform_indices = @transform_6, window_bounds = array<i64: 1, 128>}, {transform_indices = @transform_7, window_bounds = array<i64: 128, 128>}]} {
    %c0 = arith.constant 0 : index
    %c0_0 = arith.constant 0 : index
    %0 = vector.load %arg4[%c0, %c0_0] : memref<1x128xf32, #tpu.memory_space<vmem>>, vector<1x128xf32>
    %c0_1 = arith.constant 0 : index
    %c0_2 = arith.constant 0 : index
    %1 = vector.load %arg5[%c0_1, %c0_2] : memref<1x128xf32, #tpu.memory_space<vmem>>, vector<1x128xf32>
    %c0_3 = arith.constant 0 : index
    %c0_4 = arith.constant 0 : index
    %2 = vector.load %arg1[%c0_3, %c0_4] : memref<128x128xbf16, #tpu.memory_space<vmem>>, vector<128x128xbf16>
    %c0_5 = arith.constant 0 : index
    %c0_6 = arith.constant 0 : index
    %3 = vector.load %arg2[%c0_5, %c0_6] : memref<128x128xbf16, #tpu.memory_space<vmem>>, vector<128x128xbf16>
    %cst = arith.constant dense<0.000000e+00> : vector<128x128xf32>
    %4 = tpu.matmul %2, %3, %cst {dimension_numbers = #tpu.dot_dimension_numbers<[1], [0], [0], [1], [0, 0, 1, 1], [], []>} : vector<128x128xbf16>, vector<128x128xbf16>, vector<128x128xf32> -> vector<128x128xf32>
    %c0_7 = arith.constant 0 : index
    %c0_8 = arith.constant 0 : index
    %5 = vector.load %arg3[%c0_7, %c0_8] : memref<1x128xf32, #tpu.memory_space<vmem>>, vector<1x128xf32>
    %6 = vector.broadcast %5 : vector<1x128xf32> to vector<128x128xf32>
    %7 = arith.addf %4, %6 : vector<128x128xf32>
    %cst_9 = arith.constant dense<0.000000e+00> : vector<128xf32>
    %8 = vector.multi_reduction <add>, %7, %cst_9 [1] : vector<128x128xf32> to vector<128xf32>
    %9 = vector.shape_cast %8 : vector<128xf32> to vector<128x1xf32>
    %10 = arith.mulf %7, %7 : vector<128x128xf32>
    %cst_10 = arith.constant dense<0.000000e+00> : vector<128xf32>
    %11 = vector.multi_reduction <add>, %10, %cst_10 [1] : vector<128x128xf32> to vector<128xf32>
    %12 = vector.shape_cast %11 : vector<128xf32> to vector<128x1xf32>
    %cst_11 = arith.constant 3.125000e-02 : f32
    %13 = vector.broadcast %cst_11 : f32 to vector<128x1xf32>
    %14 = arith.mulf %9, %13 : vector<128x1xf32>
    %cst_12 = arith.constant 3.125000e-02 : f32
    %15 = vector.broadcast %cst_12 : f32 to vector<128x1xf32>
    %16 = arith.mulf %12, %15 : vector<128x1xf32>
    %17 = arith.mulf %14, %14 : vector<128x1xf32>
    %18 = arith.subf %16, %17 : vector<128x1xf32>
    %cst_13 = arith.constant 9.99999974E-6 : f32
    %19 = vector.broadcast %cst_13 : f32 to vector<128x1xf32>
    %20 = arith.addf %18, %19 : vector<128x1xf32>
    %21 = math.rsqrt %20 : vector<128x1xf32>
    %22 = vector.broadcast %14 : vector<128x1xf32> to vector<128x128xf32>
    %23 = arith.subf %7, %22 : vector<128x128xf32>
    %24 = vector.broadcast %21 : vector<128x1xf32> to vector<128x128xf32>
    %25 = arith.mulf %23, %24 : vector<128x128xf32>
    %26 = vector.broadcast %0 : vector<1x128xf32> to vector<128x128xf32>
    %27 = arith.mulf %25, %26 : vector<128x128xf32>
    %28 = vector.broadcast %1 : vector<1x128xf32> to vector<128x128xf32>
    %29 = arith.addf %27, %28 : vector<128x128xf32>
    %cst_14 = arith.constant 0.000000e+00 : f32
    %30 = vector.broadcast %cst_14 : f32 to vector<128x128xf32>
    %31 = arith.maximumf %29, %30 : vector<128x128xf32>
    %32 = arith.truncf %31 : vector<128x128xf32> to vector<128x128xbf16>
    %c0_15 = arith.constant 0 : index
    %c0_16 = arith.constant 0 : index
    %33 = vector.load %arg6[%c0_15, %c0_16] : memref<128x128xbf16, #tpu.memory_space<vmem>>, vector<128x128xbf16>
    %cst_17 = arith.constant dense<0.000000e+00> : vector<128x128xf32>
    %34 = tpu.matmul %32, %33, %cst_17 {dimension_numbers = #tpu.dot_dimension_numbers<[1], [0], [0], [1], [0, 0, 1, 1], [], []>} : vector<128x128xbf16>, vector<128x128xbf16>, vector<128x128xf32> -> vector<128x128xf32>
    %c0_18 = arith.constant 0 : index
    %c0_19 = arith.constant 0 : index
    %35 = vector.load %arg7[%c0_18, %c0_19] : memref<1x128xf32, #tpu.memory_space<vmem>>, vector<1x128xf32>
    %36 = vector.broadcast %35 : vector<1x128xf32> to vector<128x128xf32>
    %37 = arith.addf %34, %36 : vector<128x128xf32>
    %cst_20 = arith.constant dense<0.000000e+00> : vector<128xf32>
    %38 = vector.multi_reduction <add>, %37, %cst_20 [1] : vector<128x128xf32> to vector<128xf32>
    %39 = vector.shape_cast %38 : vector<128xf32> to vector<128x1xf32>
    %40 = arith.mulf %37, %37 : vector<128x128xf32>
    %cst_21 = arith.constant dense<0.000000e+00> : vector<128xf32>
    %41 = vector.multi_reduction <add>, %40, %cst_21 [1] : vector<128x128xf32> to vector<128xf32>
    %42 = vector.shape_cast %41 : vector<128xf32> to vector<128x1xf32>
    %cst_22 = arith.constant 3.125000e-02 : f32
    %43 = vector.broadcast %cst_22 : f32 to vector<128x1xf32>
    %44 = arith.mulf %39, %43 : vector<128x1xf32>
    %cst_23 = arith.constant 3.125000e-02 : f32
    %45 = vector.broadcast %cst_23 : f32 to vector<128x1xf32>
    %46 = arith.mulf %42, %45 : vector<128x1xf32>
    %47 = arith.mulf %44, %44 : vector<128x1xf32>
    %48 = arith.subf %46, %47 : vector<128x1xf32>
    %cst_24 = arith.constant 9.99999974E-6 : f32
    %49 = vector.broadcast %cst_24 : f32 to vector<128x1xf32>
    %50 = arith.addf %48, %49 : vector<128x1xf32>
    %51 = math.rsqrt %50 : vector<128x1xf32>
    %52 = vector.broadcast %44 : vector<128x1xf32> to vector<128x128xf32>
    %53 = arith.subf %37, %52 : vector<128x128xf32>
    %54 = vector.broadcast %51 : vector<128x1xf32> to vector<128x128xf32>
    %55 = arith.mulf %53, %54 : vector<128x128xf32>
    %56 = vector.broadcast %0 : vector<1x128xf32> to vector<128x128xf32>
    %57 = arith.mulf %55, %56 : vector<128x128xf32>
    %58 = vector.broadcast %1 : vector<1x128xf32> to vector<128x128xf32>
    %59 = arith.addf %57, %58 : vector<128x128xf32>
    %cst_25 = arith.constant 0.000000e+00 : f32
    %60 = vector.broadcast %cst_25 : f32 to vector<128x128xf32>
    %61 = arith.maximumf %59, %60 : vector<128x128xf32>
    %c0_26 = arith.constant 0 : index
    %c0_27 = arith.constant 0 : index
    %62 = vector.load %arg8[%c0_26, %c0_27] : memref<128x128xf32, #tpu.memory_space<vmem>>, vector<128x128xf32>
    tpu.vector_store %arg8[%c0_26, %c0_27], %61 {strides = array<i32>} : memref<128x128xf32, #tpu.memory_space<vmem>>, vector<128x128xf32>,
    return
  }
  func.func @transform_0(%arg0: i32) -> (i32, i32) {
    %c0_i32 = arith.constant 0 : i32
    %c0_i32_0 = arith.constant 0 : i32
    return %arg0, %c0_i32 : i32, i32
  }
  func.func @transform_1(%arg0: i32) -> (i32, i32) {
    %c0_i32 = arith.constant 0 : i32
    %c0_i32_0 = arith.constant 0 : i32
    %c0_i32_1 = arith.constant 0 : i32
    return %c0_i32, %c0_i32_0 : i32, i32
  }
  func.func @transform_2(%arg0: i32) -> (i32, i32) {
    %c0_i32 = arith.constant 0 : i32
    %c0_i32_0 = arith.constant 0 : i32
    %c0_i32_1 = arith.constant 0 : i32
    return %c0_i32, %c0_i32_0 : i32, i32
  }
  func.func @transform_3(%arg0: i32) -> (i32, i32) {
    %c0_i32 = arith.constant 0 : i32
    %c0_i32_0 = arith.constant 0 : i32
    %c0_i32_1 = arith.constant 0 : i32
    return %c0_i32, %c0_i32_0 : i32, i32
  }
  func.func @transform_4(%arg0: i32) -> (i32, i32) {
    %c0_i32 = arith.constant 0 : i32
    %c0_i32_0 = arith.constant 0 : i32
    %c0_i32_1 = arith.constant 0 : i32
    return %c0_i32, %c0_i32_0 : i32, i32
  }
  func.func @transform_5(%arg0: i32) -> (i32, i32) {
    %c0_i32 = arith.constant 0 : i32
    %c0_i32_0 = arith.constant 0 : i32
    %c0_i32_1 = arith.constant 0 : i32
    return %c0_i32, %c0_i32_0 : i32, i32
  }
  func.func @transform_6(%arg0: i32) -> (i32, i32) {
    %c0_i32 = arith.constant 0 : i32
    %c0_i32_0 = arith.constant 0 : i32
    %c0_i32_1 = arith.constant 0 : i32
    return %c0_i32, %c0_i32_0 : i32, i32
  }
  func.func @transform_7(%arg0: i32) -> (i32, i32) {
    %c0_i32 = arith.constant 0 : i32
    %c0_i32_0 = arith.constant 0 : i32
    return %arg0, %c0_i32 : i32, i32
  }
}

</mosaic_0001>

<llo_original>
// kernel: tpu_custom_call.1
$region0: #{tpu_custom_call.1}
  #allocation0 [shape = 'u32[]', space=smem, size = 0x4, offset = 0x4, fixed_abs, tag = 'smem constant byte address 0x4 - core index']
  #allocation1 [shape = 'u32[144,128]{1,0:T(1,128)}', space=vmem, size = 0x12000, scoped, tag = 'internal scratch']
  %s0 = inlined_call_operand.hbm [shape: bf16[384,128], index: 0, kind: input, shape index: {}]
  %s1 = inlined_call_operand.hbm [shape: bf16[128,128], index: 1, kind: input, shape index: {}]
  %s2 = inlined_call_operand.vmem [shape: f32[1,128], index: 2, kind: input, shape index: {}]
  %s3 = inlined_call_operand.vmem [shape: f32[1,128], index: 3, kind: input, shape index: {}]
  %s4 = inlined_call_operand.vmem [shape: f32[1,128], index: 4, kind: input, shape index: {}]
  %s5 = inlined_call_operand.hbm [shape: bf16[128,128], index: 5, kind: input, shape index: {}]
  %s6 = inlined_call_operand.vmem [shape: f32[1,128], index: 6, kind: input, shape index: {}]
  %s7 = inlined_call_operand.hbm [shape: f32[384,128], index: 7, kind: output, shape index: {}]
  %s8 = sld [smem:[#allocation0]]
  $region73: #{tpu_custom_call.1} parent=0
    _
  %s10 = ssub.s32 1, %s8
  %s11 = scalar_select 0, %s10, %s8
  $region1: #{tpu_custom_call.1} parent=0
    #allocation2 [shape = 'u8[65536]{0}', space=vmem, size = 0x10000, scoped, tag = 'input window, operand 0']
    #allocation3 [shape = 's32[2]{0}', space=sflag, size = 0x8, scoped, tag = 'scoped memory for tpu_custom_call.1']
    #allocation4 [shape = 's32[2]{0}', space=sflag, size = 0x8, scoped, tag = 'scoped memory for tpu_custom_call.1']
    #allocation5 [shape = 'u8[32768]{0}', space=vmem, size = 0x8000, scoped, tag = 'input window, operand 1, single buffered']
    #allocation6 [shape = 's32[1]{0}', space=sflag, size = 0x4, scoped, tag = 'scoped memory for tpu_custom_call.1']
    #allocation7 [shape = 'u8[32768]{0}', space=vmem, size = 0x8000, scoped, tag = 'input window, operand 5, single buffered']
    #allocation8 [shape = 'u8[131072]{0}', space=vmem, size = 0x20000, scoped, tag = 'output window, operand 0']
    %12 = vsyncpa [#allocation3], 0
    %s13 = scalar_lea.sflag [#allocation3], 1
    %14 = vsyncpa %s13, 0
    %15 = vsyncpa [#allocation6], 0
    %16 = vsyncpa [#allocation4], 0
    %s17 = scalar_lea.sflag [#allocation4], 1
    %18 = vsyncpa %s17, 0
    loop: start=0, step=1, limit=5
    $region2: #{tpu_custom_call.1} parent=1 // loop_pre_header
      _
    $region3: #{tpu_custom_call.1} parent=1 // loop_header
      %s20 = sphi 0, %s24
      %p21 = scmp.ge.s32.totalorder %s20, 5
      %s30 = sphi 0, %s32
      %s33 = sphi 0, %s30
      %s34 = sphi 0, %s33
      %s50 = sphi 0, %s34
      %s54 = sphi 0, %s54
      %s56 = sphi 0, %s54
      %s57 = sphi 0, %s56
      %s71 = sphi 0, %s57
      %s75 = sphi 0, %s75
      %s77 = sphi 0, %s75
      %s78 = sphi 0, %s77
      %s92 = sphi 0, %s78
      %s96 = sphi 0, %s96
      %s98 = sphi 0, %s96
      %s99 = sphi 0, %s98
      %s113 = sphi 0, %s99
      %s117 = sphi 0, %s117
      %s119 = sphi 0, %s117
      %s120 = sphi 0, %s119
      %s134 = sphi 0, %s120
      %s138 = sphi 0, %s138
      %s140 = sphi 0, %s138
      %s141 = sphi 0, %s140
      %s155 = sphi 0, %s141
      %s159 = sphi 0, %s159
      %s161 = sphi 0, %s159
      %s162 = sphi 0, %s161
      %s176 = sphi 0, %s162
      %s182 = sphi 0, %s184
      %s185 = sphi 0, %s182
      %s186 = sphi 0, %s185
      %s202 = sphi 0, %s186
    $region4: #{tpu_custom_call.1} parent=1 // loop_header_branch
      %23 = sbr.rel (%p21) target = $region8
    $region5: #{tpu_custom_call.1} parent=1 // loop_body
      %s25 = ssub.s32 %s20, 1
      %s26 = ssub.s32 %s20, 2
      %s27 = sadd.s32 %s20, 1
      %s28 = ssub.s32 %s20, %s27
      %p29 = scmp.eq.s32.totalorder %s28, 0
      %s31 = sadd.s32 %s30, 1
      %s32 = scalar_select %p29, %s30, %s31
      %p35 = pneg %p29
      %p36 = scmp.eq.s32.totalorder %s20, 2
      %p37 = por %p35, %p36
      %p38 = scmp.ne.s32.totalorder %s30, %s33
      %p39 = scmp.eq.s32.totalorder %s20, 0
      %p40 = por %p38, %p39
      %p41 = scmp.ne.s32.totalorder %s30, %s33
      %p42 = scmp.eq.s32.totalorder %s25, 2
      %p43 = por %p41, %p42
      %p44 = scmp.ne.s32.totalorder %s33, %s34
      %p45 = scmp.eq.s32.totalorder %s25, 0
      %p46 = por %p44, %p45
      %p47 = scmp.ne.s32.totalorder %s33, %s34
      %p48 = scmp.eq.s32.totalorder %s26, 2
      %p49 = por %p47, %p48
      %p51 = scmp.ne.s32.totalorder %s34, %s50
      %p52 = scmp.eq.s32.totalorder %s26, 0
      %p53 = por %p51, %p52
      %s55 = sadd.s32 %s54, 1
      %p58 = scmp.eq.s32.totalorder %s20, 2
      %p59 = scmp.ne.s32.totalorder %s54, %s56
      %p60 = scmp.eq.s32.totalorder %s20, 0
      %p61 = por %p59, %p60
      %p62 = scmp.ne.s32.totalorder %s54, %s56
      %p63 = scmp.eq.s32.totalorder %s25, 2
      %p64 = por %p62, %p63
      %p65 = scmp.ne.s32.totalorder %s56, %s57
      %p66 = scmp.eq.s32.totalorder %s25, 0
      %p67 = por %p65, %p66
      %p68 = scmp.ne.s32.totalorder %s56, %s57
      %p69 = scmp.eq.s32.totalorder %s26, 2
      %p70 = por %p68, %p69
      %p72 = scmp.ne.s32.totalorder %s57, %s71
      %p73 = scmp.eq.s32.totalorder %s26, 0
      %p74 = por %p72, %p73
      %s76 = sadd.s32 %s75, 1
      %p79 = scmp.eq.s32.totalorder %s20, 2
      %p80 = scmp.ne.s32.totalorder %s75, %s77
      %p81 = scmp.eq.s32.totalorder %s20, 0
      %p82 = por %p80, %p81
      %p83 = scmp.ne.s32.totalorder %s75, %s77
      %p84 = scmp.eq.s32.totalorder %s25, 2
      %p85 = por %p83, %p84
      %p86 = scmp.ne.s32.totalorder %s77, %s78
      %p87 = scmp.eq.s32.totalorder %s25, 0
      %p88 = por %p86, %p87
      %p89 = scmp.ne.s32.totalorder %s77, %s78
      %p90 = scmp.eq.s32.totalorder %s26, 2
      %p91 = por %p89, %p90
      %p93 = scmp.ne.s32.totalorder %s78, %s92
      %p94 = scmp.eq.s32.totalorder %s26, 0
      %p95 = por %p93, %p94
      %s97 = sadd.s32 %s96, 1
      %p100 = scmp.eq.s32.totalorder %s20, 2
      %p101 = scmp.ne.s32.totalorder %s96, %s98
      %p102 = scmp.eq.s32.totalorder %s20, 0
      %p103 = por %p101, %p102
      %p104 = scmp.ne.s32.totalorder %s96, %s98
      %p105 = scmp.eq.s32.totalorder %s25, 2
      %p106 = por %p104, %p105
      %p107 = scmp.ne.s32.totalorder %s98, %s99
      %p108 = scmp.eq.s32.totalorder %s25, 0
      %p109 = por %p107, %p108
      %p110 = scmp.ne.s32.totalorder %s98, %s99
      %p111 = scmp.eq.s32.totalorder %s26, 2
      %p112 = por %p110, %p111
      %p114 = scmp.ne.s32.totalorder %s99, %s113
      %p115 = scmp.eq.s32.totalorder %s26, 0
      %p116 = por %p114, %p115
      %s118 = sadd.s32 %s117, 1
      %p121 = scmp.eq.s32.totalorder %s20, 2
      %p122 = scmp.ne.s32.totalorder %s117, %s119
      %p123 = scmp.eq.s32.totalorder %s20, 0
      %p124 = por %p122, %p123
      %p125 = scmp.ne.s32.totalorder %s117, %s119
      %p126 = scmp.eq.s32.totalorder %s25, 2
      %p127 = por %p125, %p126
      %p128 = scmp.ne.s32.totalorder %s119, %s120
      %p129 = scmp.eq.s32.totalorder %s25, 0
      %p130 = por %p128, %p129
      %p131 = scmp.ne.s32.totalorder %s119, %s120
      %p132 = scmp.eq.s32.totalorder %s26, 2
      %p133 = por %p131, %p132
      %p135 = scmp.ne.s32.totalorder %s120, %s134
      %p136 = scmp.eq.s32.totalorder %s26, 0
      %p137 = por %p135, %p136
      %s139 = sadd.s32 %s138, 1
      %p142 = scmp.eq.s32.totalorder %s20, 2
      %p143 = scmp.ne.s32.totalorder %s138, %s140
      %p144 = scmp.eq.s32.totalorder %s20, 0
      %p145 = por %p143, %p144
      %p146 = scmp.ne.s32.totalorder %s138, %s140
      %p147 = scmp.eq.s32.totalorder %s25, 2
      %p148 = por %p146, %p147
      %p149 = scmp.ne.s32.totalorder %s140, %s141
      %p150 = scmp.eq.s32.totalorder %s25, 0
      %p151 = por %p149, %p150
      %p152 = scmp.ne.s32.totalorder %s140, %s141
      %p153 = scmp.eq.s32.totalorder %s26, 2
      %p154 = por %p152, %p153
      %p156 = scmp.ne.s32.totalorder %s141, %s155
      %p157 = scmp.eq.s32.totalorder %s26, 0
      %p158 = por %p156, %p157
      %s160 = sadd.s32 %s159, 1
      %p163 = scmp.eq.s32.totalorder %s20, 2
      %p164 = scmp.ne.s32.totalorder %s159, %s161
      %p165 = scmp.eq.s32.totalorder %s20, 0
      %p166 = por %p164, %p165
      %p167 = scmp.ne.s32.totalorder %s159, %s161
      %p168 = scmp.eq.s32.totalorder %s25, 2
      %p169 = por %p167, %p168
      %p170 = scmp.ne.s32.totalorder %s161, %s162
      %p171 = scmp.eq.s32.totalorder %s25, 0
      %p172 = por %p170, %p171
      %p173 = scmp.ne.s32.totalorder %s161, %s162
      %p174 = scmp.eq.s32.totalorder %s26, 2
      %p175 = por %p173, %p174
      %p177 = scmp.ne.s32.totalorder %s162, %s176
      %p178 = scmp.eq.s32.totalorder %s26, 0
      %p179 = por %p177, %p178
      %s180 = ssub.s32 %s20, %s27
      %p181 = scmp.eq.s32.totalorder %s180, 0
      %s183 = sadd.s32 %s182, 1
      %s184 = scalar_select %p181, %s182, %s183
      %p187 = pneg %p181
      %p188 = scmp.eq.s32.totalorder %s20, 2
      %p189 = por %p187, %p188
      %p190 = scmp.ne.s32.totalorder %s182, %s185
      %p191 = scmp.eq.s32.totalorder %s20, 0
      %p192 = por %p190, %p191
      %p193 = scmp.ne.s32.totalorder %s182, %s185
      %p194 = scmp.eq.s32.totalorder %s25, 2
      %p195 = por %p193, %p194
      %p196 = scmp.ne.s32.totalorder %s185, %s186
      %p197 = scmp.eq.s32.totalorder %s25, 0
      %p198 = por %p196, %p197
      %p199 = scmp.ne.s32.totalorder %s185, %s186
      %p200 = scmp.eq.s32.totalorder %s26, 2
      %p201 = por %p199, %p200
      %p203 = scmp.ne.s32.totalorder %s186, %s202
      %p204 = scmp.eq.s32.totalorder %s26, 0
      %p205 = por %p203, %p204
      %p206 = scmp.le.s32.totalorder 1, %s20
      %p207 = scmp.lt.s32.totalorder %s20, 4
      %p208 = pnand %p206, %p207
      %p209 = pneg %p208
      // Predicated region
      $region9: #{tpu_custom_call.1} parent=5 // pred_check
        _
      $region10: #{tpu_custom_call.1} parent=5 // pred_check_branch
        %211 = sbr.rel (%p208) target = $region12
      $region11: #{tpu_custom_call.1} parent=5 // pred_region
        %s212 = ssub.s32 %s20, 1
        // Predicated region
        $region13: #{tpu_custom_call.1} parent=11 // pred_check
          %p213 = pneg %p67
        $region14: #{tpu_custom_call.1} parent=11 // pred_check_branch
          %215 = sbr.rel (%p213) target = $region16
        $region15: #{tpu_custom_call.1} parent=11 // pred_region
          %s217 = ssub.s32 1024, 1024
          %218 = vsyncadd [#allocation6], %s217
          %s219 = sshll.u32 [#allocation5], 4
          %s220 = int_to_ptr.vmem [resolvable:$true] %s219
          %225 = dma.hbm_to_vmem [thread:$0]  %s1, 1024, %s220, [#allocation6], 64, 64, 4
        $region16: #{tpu_custom_call.1} parent=11 // pred_fallthru
          _
        // Predicated region
        $region17: #{tpu_custom_call.1} parent=11 // pred_check
          %p226 = pneg %p88
        $region18: #{tpu_custom_call.1} parent=11 // pred_check_branch
          %228 = sbr.rel (%p226) target = $region20
        $region19: #{tpu_custom_call.1} parent=11 // pred_region
          _
        $region20: #{tpu_custom_call.1} parent=11 // pred_fallthru
          _
        // Predicated region
        $region21: #{tpu_custom_call.1} parent=11 // pred_check
          %p229 = pneg %p109
        $region22: #{tpu_custom_call.1} parent=11 // pred_check_branch
          %231 = sbr.rel (%p229) target = $region24
        $region23: #{tpu_custom_call.1} parent=11 // pred_region
          _
        $region24: #{tpu_custom_call.1} parent=11 // pred_fallthru
          _
        // Predicated region
        $region25: #{tpu_custom_call.1} parent=11 // pred_check
          %p232 = pneg %p130
        $region26: #{tpu_custom_call.1} parent=11 // pred_check_branch
          %234 = sbr.rel (%p232) target = $region28
        $region27: #{tpu_custom_call.1} parent=11 // pred_region
          _
        $region28: #{tpu_custom_call.1} parent=11 // pred_fallthru
          _
        // Predicated region
        $region29: #{tpu_custom_call.1} parent=11 // pred_check
          %p235 = pneg %p151
        $region30: #{tpu_custom_call.1} parent=11 // pred_check_branch
          %237 = sbr.rel (%p235) target = $region32
        $region31: #{tpu_custom_call.1} parent=11 // pred_region
          %s239 = ssub.s32 1024, 1024
          %240 = vsyncadd [#allocation6], %s239
          %s241 = sshll.u32 [#allocation7], 4
          %s242 = int_to_ptr.vmem [resolvable:$true] %s241
          %247 = dma.hbm_to_vmem [thread:$0]  %s5, 1024, %s242, [#allocation6], 64, 64, 4
        $region32: #{tpu_custom_call.1} parent=11 // pred_fallthru
          _
        // Predicated region
        $region33: #{tpu_custom_call.1} parent=11 // pred_check
          %p248 = pneg %p172
        $region34: #{tpu_custom_call.1} parent=11 // pred_check_branch
          %250 = sbr.rel (%p248) target = $region36
        $region35: #{tpu_custom_call.1} parent=11 // pred_region
          _
        $region36: #{tpu_custom_call.1} parent=11 // pred_fallthru
          _
      $region12: #{tpu_custom_call.1} parent=5 // pred_fallthru
        _
      %p251 = scmp.lt.s32.totalorder %s20, 3
      // Predicated region
      $region37: #{tpu_custom_call.1} parent=5 // pred_check
        %p252 = pneg %p251
      $region38: #{tpu_custom_call.1} parent=5 // pred_check_branch
        %254 = sbr.rel (%p252) target = $region40
      $region39: #{tpu_custom_call.1} parent=5 // pred_region
        // Predicated region
        $region41: #{tpu_custom_call.1} parent=39 // pred_check
          %p255 = pneg %p40
        $region42: #{tpu_custom_call.1} parent=39 // pred_check_branch
          %257 = sbr.rel (%p255) target = $region44
        $region43: #{tpu_custom_call.1} parent=39 // pred_region
          %s258 = sand.u32 %s30, 1
          %s259 = scalar_lea.sflag [#allocation3], %s258
          %s260 = sand.u32 %s30, 1
          %s261 = smul.addr %s260, 64
          %s262 = scalar_lea.vmem [#allocation2], %s261
          %s263 = smul.u32 16, %s20
          %s265 = ssub.s32 1024, 1024
          %266 = vsyncadd %s259, %s265
          %s267 = smul.addr %s263, 64
          %s268 = scalar_lea.hbm %s0, %s267
          %s269 = sshll.u32 %s262, 4
          %s270 = int_to_ptr.vmem [resolvable:$true] %s269
          %275 = dma.hbm_to_vmem [thread:$0]  %s268, 1024, %s270, %s259, 64, 64, 4
        $region44: #{tpu_custom_call.1} parent=39 // pred_fallthru
          _
      $region40: #{tpu_custom_call.1} parent=5 // pred_fallthru
        _
      %p276 = scmp.le.s32.totalorder 1, %s20
      %p277 = scmp.lt.s32.totalorder %s20, 4
      %p278 = pnand %p276, %p277
      %p279 = pneg %p278
      // Predicated region
      $region45: #{tpu_custom_call.1} parent=5 // pred_check
        _
      $region46: #{tpu_custom_call.1} parent=5 // pred_check_branch
        %281 = sbr.rel (%p278) target = $region48
      $region47: #{tpu_custom_call.1} parent=5 // pred_region
        %s282 = ssub.s32 %s20, 1
        %s283 = sand.u32 %s33, 1
        %s284 = scalar_lea.sflag [#allocation3], %s283
        %s285 = sand.u32 %s33, 1
        %s286 = smul.addr %s285, 64
        %s287 = scalar_lea.vmem [#allocation2], %s286
        // Predicated region
        $region49: #{tpu_custom_call.1} parent=47 // pred_check
          %p288 = pneg %p46
        $region50: #{tpu_custom_call.1} parent=47 // pred_check_branch
          %290 = sbr.rel (%p288) target = $region52
        $region51: #{tpu_custom_call.1} parent=47 // pred_region
          %291 = dma.done %s284, 1024
        $region52: #{tpu_custom_call.1} parent=47 // pred_fallthru
          _
        // Predicated region
        $region53: #{tpu_custom_call.1} parent=47 // pred_check
          %p292 = pneg %p67
        $region54: #{tpu_custom_call.1} parent=47 // pred_check_branch
          %294 = sbr.rel (%p292) target = $region56
        $region55: #{tpu_custom_call.1} parent=47 // pred_region
          %295 = dma.done [#allocation6], 1024
        $region56: #{tpu_custom_call.1} parent=47 // pred_fallthru
          _
        // Predicated region
        $region57: #{tpu_custom_call.1} parent=47 // pred_check
          %p296 = pneg %p151
        $region58: #{tpu_custom_call.1} parent=47 // pred_check_branch
          %298 = sbr.rel (%p296) target = $region60
        $region59: #{tpu_custom_call.1} parent=47 // pred_region
          %299 = dma.done [#allocation6], 1024
        $region60: #{tpu_custom_call.1} parent=47 // pred_fallthru
          _
        %s300 = sand.u32 %s33, 1
        %s301 = scalar_lea.sflag [#allocation3], %s300
        %s302 = sand.u32 %s33, 1
        %s303 = smul.addr %s302, 64
        %s304 = scalar_lea.vmem [#allocation2], %s303
        %p305 = pneg %p46
        %p306 = pneg %p43
        %p307 = pneg %p67
        %p308 = pneg %p64
        %p309 = pneg %p88
        %p310 = pneg %p85
        %p311 = pneg %p109
        %p312 = pneg %p106
        %p313 = pneg %p130
        %p314 = pneg %p127
        %p315 = pneg %p151
        %p316 = pneg %p148
        %p317 = pneg %p172
        %p318 = pneg %p169
        %p319 = pneg %p198
        %p320 = pneg %p195
        %s321 = sand.u32 %s185, 1
        %s322 = scalar_lea.sflag [#allocation4], %s321
        %s323 = sand.u32 %s185, 1
        %s324 = smul.addr %s323, 128
        %s325 = scalar_lea.vmem [#allocation8], %s324
        %s326 = smul.u32 16, %s25
        %s327 = smul.u32 16, %s25
        %v329 = vld [vmem:[%s3] sm:$0x1]
        %v330 = vld [vmem:[%s4] sm:$0x1]
        %v331 = vld [vmem:[%s287] sm:$0xf]
        %v332 = vld [vmem:[%s287 + $0x4] sm:$0xf]
        %v333 = vld [vmem:[%s287 + $0x8] sm:$0xf]
        %v334 = vld [vmem:[%s287 + $0xc] sm:$0xf]
        %v335 = vld [vmem:[%s287 + $0x10] sm:$0xf]
        %v336 = vld [vmem:[%s287 + $0x14] sm:$0xf]
        %v337 = vld [vmem:[%s287 + $0x18] sm:$0xf]
        %v338 = vld [vmem:[%s287 + $0x1c] sm:$0xf]
        %v339 = vld [vmem:[%s287 + $0x20] sm:$0xf]
        %v340 = vld [vmem:[%s287 + $0x24] sm:$0xf]
        %v341 = vld [vmem:[%s287 + $0x28] sm:$0xf]
        %v342 = vld [vmem:[%s287 + $0x2c] sm:$0xf]
        %v343 = vld [vmem:[%s287 + $0x30] sm:$0xf]
        %v344 = vld [vmem:[%s287 + $0x34] sm:$0xf]
        %v345 = vld [vmem:[%s287 + $0x38] sm:$0xf]
        %v346 = vld [vmem:[%s287 + $0x3c] sm:$0xf]
        %v347 = vld [vmem:[#allocation5] sm:$0xf]
        %v348 = vld [vmem:[#allocation5 + $0x4] sm:$0xf]
        %v349 = vld [vmem:[#allocation5 + $0x8] sm:$0xf]
        %v350 = vld [vmem:[#allocation5 + $0xc] sm:$0xf]
        %v351 = vld [vmem:[#allocation5 + $0x10] sm:$0xf]
        %v352 = vld [vmem:[#allocation5 + $0x14] sm:$0xf]
        %v353 = vld [vmem:[#allocation5 + $0x18] sm:$0xf]
        %v354 = vld [vmem:[#allocation5 + $0x1c] sm:$0xf]
        %v355 = vld [vmem:[#allocation5 + $0x20] sm:$0xf]
        %v356 = vld [vmem:[#allocation5 + $0x24] sm:$0xf]
        %v357 = vld [vmem:[#allocation5 + $0x28] sm:$0xf]
        %v358 = vld [vmem:[#allocation5 + $0x2c] sm:$0xf]
        %v359 = vld [vmem:[#allocation5 + $0x30] sm:$0xf]
        %v360 = vld [vmem:[#allocation5 + $0x34] sm:$0xf]
        %v361 = vld [vmem:[#allocation5 + $0x38] sm:$0xf]
        %v362 = vld [vmem:[#allocation5 + $0x3c] sm:$0xf]
        %v363 = vld [vmem:[%s2] sm:$0x1]
        %v365 = vlaneseq
        %v366 = vshrl.u32 %v365, 7
        %v367 = vsub.s32 0, %v366
        %v368 = vrot.slane %v363, %v367
        %v386 = vunpack.c.l.b16 %v331
        %v387 = vunpack.c.l.b16 %v332
        %v388 = vunpack.c.l.b16 %v333
        %v389 = vunpack.c.l.b16 %v334
        %v390 = vunpack.c.l.b16 %v335
        %v391 = vunpack.c.l.b16 %v336
        %v392 = vunpack.c.l.b16 %v337
        %v393 = vunpack.c.l.b16 %v338
        %v394 = vunpack.c.l.b16 %v339
        %v395 = vunpack.c.l.b16 %v340
        %v396 = vunpack.c.l.b16 %v341
        %v397 = vunpack.c.l.b16 %v342
        %v398 = vunpack.c.l.b16 %v343
        %v399 = vunpack.c.l.b16 %v344
        %v400 = vunpack.c.l.b16 %v345
        %v401 = vunpack.c.l.b16 %v346
        %v402 = vpack.c.b16 %v387, %v386
        %v403 = vpack.c.b16 %v389, %v388
        %v404 = vpack.c.b16 %v391, %v390
        %v405 = vpack.c.b16 %v393, %v392
        %v406 = vpack.c.b16 %v395, %v394
        %v407 = vpack.c.b16 %v397, %v396
        %v408 = vpack.c.b16 %v399, %v398
        %v409 = vpack.c.b16 %v401, %v400
        %v434 = vunpack.c.l.b16 %v347
        %v435 = vunpack.c.l.b16 %v348
        %v436 = vunpack.c.l.b16 %v349
        %v437 = vunpack.c.l.b16 %v350
        %v438 = vunpack.c.l.b16 %v351
        %v439 = vunpack.c.l.b16 %v352
        %v440 = vunpack.c.l.b16 %v353
        %v441 = vunpack.c.l.b16 %v354
        %v442 = vunpack.c.l.b16 %v355
        %v443 = vunpack.c.l.b16 %v356
        %v444 = vunpack.c.l.b16 %v357
        %v445 = vunpack.c.l.b16 %v358
        %v446 = vunpack.c.l.b16 %v359
        %v447 = vunpack.c.l.b16 %v360
        %v448 = vunpack.c.l.b16 %v361
        %v449 = vunpack.c.l.b16 %v362
        %v450 = vpack.c.b16 %v435, %v434
        %v451 = vpack.c.b16 %v437, %v436
        %v452 = vpack.c.b16 %v439, %v438
        %v453 = vpack.c.b16 %v441, %v440
        %v454 = vpack.c.b16 %v443, %v442
        %v455 = vpack.c.b16 %v445, %v444
        %v456 = vpack.c.b16 %v447, %v446
        %v457 = vpack.c.b16 %v449, %v448
        %466 = vmatprep.subr.bf16.mxu0 0
        %467 = vmatpush1.bf16.msra.mxu0 %v457
        %468 = vmatprep.subr.bf16.mxu0 0
        %469 = vmatpush1.bf16.msra.mxu0 %v456
        %470 = vmatprep.subr.bf16.mxu0 0
        %471 = vmatpush1.bf16.msra.mxu0 %v455
        %472 = vmatprep.subr.bf16.mxu0 0
        %473 = vmatpush1.bf16.msra.mxu0 %v454
        %474 = vmatprep.subr.bf16.mxu0 0
        %475 = vmatpush1.bf16.msra.mxu0 %v453
        %476 = vmatprep.subr.bf16.mxu0 0
        %477 = vmatpush1.bf16.msra.mxu0 %v452
        %478 = vmatprep.subr.bf16.mxu0 0
        %479 = vmatpush1.bf16.msra.mxu0 %v451
        %480 = vmatprep.subr.bf16.mxu0 0
        %481 = vmatpush1.bf16.msra.mxu0 %v450
        %482 = vmatprep.subr.bf16.mxu0 0
        %483 = vmatpush2.bf16.msra.mxu0 0
        %484 = vmatprep.subr.bf16.mxu0 0
        %485 = vmatpush2.bf16.msra.mxu0 0
        %486 = vmatprep.subr.bf16.mxu0 0
        %487 = vmatpush2.bf16.msra.mxu0 0
        %488 = vmatprep.subr.bf16.mxu0 0
        %489 = vmatpush2.bf16.msra.mxu0 0
        %490 = vmatprep.subr.bf16.mxu0 0
        %491 = vmatpush2.bf16.msra.mxu0 0
        %492 = vmatprep.subr.bf16.mxu0 0
        %493 = vmatpush2.bf16.msra.mxu0 0
        %494 = vmatprep.subr.bf16.mxu0 0
        %495 = vmatpush2.bf16.msra.mxu0 0
        %496 = vmatprep.subr.bf16.mxu0 0
        %497 = vmatpush2.bf16.msra.mxu0 0
        %498 = vmatprep.mubr.bf16.mxu0 0
        %499 = vmatmul.mubr.bf16.gmra.mxu0 %v402
        %v500 = vpop.f32.mrf.mxu0
        %v501 = vadd.f32 %v368, %v500
        %v502 = vpop.f32.mrf.mxu0
        %v503 = vpop.f32.mrf.mxu0
        %v504 = vadd.f32 %v368, %v503
        %v505 = vpop.f32.mrf.mxu0
        %506 = vmatprep.mubr.bf16.mxu0 0
        %507 = vmatmul.mubr.bf16.gmra.mxu0 %v403
        %v508 = vpop.f32.mrf.mxu0
        %v509 = vadd.f32 %v368, %v508
        %v510 = vpop.f32.mrf.mxu0
        %v511 = vpop.f32.mrf.mxu0
        %v512 = vadd.f32 %v368, %v511
        %v513 = vpop.f32.mrf.mxu0
        %514 = vmatprep.mubr.bf16.mxu0 0
        %515 = vmatmul.mubr.bf16.gmra.mxu0 %v404
        %v516 = vpop.f32.mrf.mxu0
        %v517 = vadd.f32 %v368, %v516
        %v518 = vpop.f32.mrf.mxu0
        %v519 = vpop.f32.mrf.mxu0
        %v520 = vadd.f32 %v368, %v519
        %v521 = vpop.f32.mrf.mxu0
        %522 = vmatprep.mubr.bf16.mxu0 0
        %523 = vmatmul.mubr.bf16.gmra.mxu0 %v405
        %v524 = vpop.f32.mrf.mxu0
        %v525 = vadd.f32 %v368, %v524
        %v526 = vpop.f32.mrf.mxu0
        %v527 = vpop.f32.mrf.mxu0
        %v528 = vadd.f32 %v368, %v527
        %v529 = vpop.f32.mrf.mxu0
        %530 = vmatprep.mubr.bf16.mxu0 0
        %531 = vmatmul.mubr.bf16.gmra.mxu0 %v406
        %v532 = vpop.f32.mrf.mxu0
        %v533 = vadd.f32 %v368, %v532
        %v534 = vpop.f32.mrf.mxu0
        %v535 = vpop.f32.mrf.mxu0
        %v536 = vadd.f32 %v368, %v535
        %v537 = vpop.f32.mrf.mxu0
        %538 = vmatprep.mubr.bf16.mxu0 0
        %539 = vmatmul.mubr.bf16.gmra.mxu0 %v407
        %v540 = vpop.f32.mrf.mxu0
        %v541 = vadd.f32 %v368, %v540
        %v542 = vpop.f32.mrf.mxu0
        %v543 = vpop.f32.mrf.mxu0
        %v544 = vadd.f32 %v368, %v543
        %v545 = vpop.f32.mrf.mxu0
        %546 = vmatprep.mubr.bf16.mxu0 0
        %547 = vmatmul.mubr.bf16.gmra.mxu0 %v408
        %v548 = vpop.f32.mrf.mxu0
        %v549 = vadd.f32 %v368, %v548
        %v550 = vpop.f32.mrf.mxu0
        %v551 = vpop.f32.mrf.mxu0
        %v552 = vadd.f32 %v368, %v551
        %v553 = vpop.f32.mrf.mxu0
        %554 = vmatprep.mubr.bf16.mxu0 0
        %555 = vmatmul.mubr.bf16.gmra.mxu0 %v409
        %v556 = vpop.f32.mrf.mxu0
        %v557 = vadd.f32 %v368, %v556
        %v558 = vpop.f32.mrf.mxu0
        %v559 = vpop.f32.mrf.mxu0
        %v560 = vadd.f32 %v368, %v559
        %v561 = vpop.f32.mrf.mxu0
        %562 = vdwg.mxu0
        %563 = vadd.xlane.f32.xlu0 %v501
        %v564 = vpop.xlane.xlu0 %563
        %565 = vadd.xlane.f32.xlu0 %v504
        %v566 = vpop.xlane.xlu0 %565
        %567 = vadd.xlane.f32.xlu0 %v509
        %v568 = vpop.xlane.xlu0 %567
        %569 = vadd.xlane.f32.xlu0 %v512
        %v570 = vpop.xlane.xlu0 %569
        %571 = vadd.xlane.f32.xlu0 %v517
        %v572 = vpop.xlane.xlu0 %571
        %573 = vadd.xlane.f32.xlu0 %v520
        %v574 = vpop.xlane.xlu0 %573
        %575 = vadd.xlane.f32.xlu0 %v525
        %v576 = vpop.xlane.xlu0 %575
        %577 = vadd.xlane.f32.xlu0 %v528
        %v578 = vpop.xlane.xlu0 %577
        %579 = vadd.xlane.f32.xlu0 %v533
        %v580 = vpop.xlane.xlu0 %579
        %581 = vadd.xlane.f32.xlu0 %v536
        %v582 = vpop.xlane.xlu0 %581
        %583 = vadd.xlane.f32.xlu0 %v541
        %v584 = vpop.xlane.xlu0 %583
        %585 = vadd.xlane.f32.xlu0 %v544
        %v586 = vpop.xlane.xlu0 %585
        %587 = vadd.xlane.f32.xlu0 %v549
        %v588 = vpop.xlane.xlu0 %587
        %589 = vadd.xlane.f32.xlu0 %v552
        %v590 = vpop.xlane.xlu0 %589
        %591 = vadd.xlane.f32.xlu0 %v557
        %v592 = vpop.xlane.xlu0 %591
        %593 = vadd.xlane.f32.xlu0 %v560
        %v594 = vpop.xlane.xlu0 %593
        %v595 = vmul.f32 %v501, %v501
        %v596 = vmul.f32 %v504, %v504
        %v597 = vmul.f32 %v509, %v509
        %v598 = vmul.f32 %v512, %v512
        %v599 = vmul.f32 %v517, %v517
        %v600 = vmul.f32 %v520, %v520
        %v601 = vmul.f32 %v525, %v525
        %v602 = vmul.f32 %v528, %v528
        %v603 = vmul.f32 %v533, %v533
        %v604 = vmul.f32 %v536, %v536
        %v605 = vmul.f32 %v541, %v541
        %v606 = vmul.f32 %v544, %v544
        %v607 = vmul.f32 %v549, %v549
        %v608 = vmul.f32 %v552, %v552
        %v609 = vmul.f32 %v557, %v557
        %v610 = vmul.f32 %v560, %v560
        %611 = vadd.xlane.f32.xlu0 %v595
        %v612 = vpop.xlane.xlu0 %611
        %613 = vadd.xlane.f32.xlu0 %v596
        %v614 = vpop.xlane.xlu0 %613
        %615 = vadd.xlane.f32.xlu0 %v597
        %v616 = vpop.xlane.xlu0 %615
        %617 = vadd.xlane.f32.xlu0 %v598
        %v618 = vpop.xlane.xlu0 %617
        %619 = vadd.xlane.f32.xlu0 %v599
        %v620 = vpop.xlane.xlu0 %619
        %621 = vadd.xlane.f32.xlu0 %v600
        %v622 = vpop.xlane.xlu0 %621
        %623 = vadd.xlane.f32.xlu0 %v601
        %v624 = vpop.xlane.xlu0 %623
        %625 = vadd.xlane.f32.xlu0 %v602
        %v626 = vpop.xlane.xlu0 %625
        %627 = vadd.xlane.f32.xlu0 %v603
        %v628 = vpop.xlane.xlu0 %627
        %629 = vadd.xlane.f32.xlu0 %v604
        %v630 = vpop.xlane.xlu0 %629
        %631 = vadd.xlane.f32.xlu0 %v605
        %v632 = vpop.xlane.xlu0 %631
        %633 = vadd.xlane.f32.xlu0 %v606
        %v634 = vpop.xlane.xlu0 %633
        %635 = vadd.xlane.f32.xlu0 %v607
        %v636 = vpop.xlane.xlu0 %635
        %637 = vadd.xlane.f32.xlu0 %v608
        %v638 = vpop.xlane.xlu0 %637
        %639 = vadd.xlane.f32.xlu0 %v609
        %v640 = vpop.xlane.xlu0 %639
        %641 = vadd.xlane.f32.xlu0 %v610
        %v642 = vpop.xlane.xlu0 %641
        %v643 = vmul.f32 %v564, 0.03125
        %v644 = vmul.f32 %v566, 0.03125
        %v645 = vmul.f32 %v568, 0.03125
        %v646 = vmul.f32 %v570, 0.03125
        %v647 = vmul.f32 %v572, 0.03125
        %v648 = vmul.f32 %v574, 0.03125
        %v649 = vmul.f32 %v576, 0.03125
        %v650 = vmul.f32 %v578, 0.03125
        %v651 = vmul.f32 %v580, 0.03125
        %v652 = vmul.f32 %v582, 0.03125
        %v653 = vmul.f32 %v584, 0.03125
        %v654 = vmul.f32 %v586, 0.03125
        %v655 = vmul.f32 %v588, 0.03125
        %v656 = vmul.f32 %v590, 0.03125
        %v657 = vmul.f32 %v592, 0.03125
        %v658 = vmul.f32 %v594, 0.03125
        %v659 = vmul.f32 %v612, 0.03125
        %v660 = vmul.f32 %v614, 0.03125
        %v661 = vmul.f32 %v616, 0.03125
        %v662 = vmul.f32 %v618, 0.03125
        %v663 = vmul.f32 %v620, 0.03125
        %v664 = vmul.f32 %v622, 0.03125
        %v665 = vmul.f32 %v624, 0.03125
        %v666 = vmul.f32 %v626, 0.03125
        %v667 = vmul.f32 %v628, 0.03125
        %v668 = vmul.f32 %v630, 0.03125
        %v669 = vmul.f32 %v632, 0.03125
        %v670 = vmul.f32 %v634, 0.03125
        %v671 = vmul.f32 %v636, 0.03125
        %v672 = vmul.f32 %v638, 0.03125
        %v673 = vmul.f32 %v640, 0.03125
        %v674 = vmul.f32 %v642, 0.03125
        %v675 = vmul.f32 %v643, %v643
        %v676 = vmul.f32 %v644, %v644
        %v677 = vmul.f32 %v645, %v645
        %v678 = vmul.f32 %v646, %v646
        %v679 = vmul.f32 %v647, %v647
        %v680 = vmul.f32 %v648, %v648
        %v681 = vmul.f32 %v649, %v649
        %v682 = vmul.f32 %v650, %v650
        %v683 = vmul.f32 %v651, %v651
        %v684 = vmul.f32 %v652, %v652
        %v685 = vmul.f32 %v653, %v653
        %v686 = vmul.f32 %v654, %v654
        %v687 = vmul.f32 %v655, %v655
        %v688 = vmul.f32 %v656, %v656
        %v689 = vmul.f32 %v657, %v657
        %v690 = vmul.f32 %v658, %v658
        %v691 = vsub.f32 %v659, %v675
        %v692 = vsub.f32 %v660, %v676
        %v693 = vsub.f32 %v661, %v677
        %v694 = vsub.f32 %v662, %v678
        %v695 = vsub.f32 %v663, %v679
        %v696 = vsub.f32 %v664, %v680
        %v697 = vsub.f32 %v665, %v681
        %v698 = vsub.f32 %v666, %v682
        %v699 = vsub.f32 %v667, %v683
        %v700 = vsub.f32 %v668, %v684
        %v701 = vsub.f32 %v669, %v685
        %v702 = vsub.f32 %v670, %v686
        %v703 = vsub.f32 %v671, %v687
        %v704 = vsub.f32 %v672, %v688
        %v705 = vsub.f32 %v673, %v689
        %v706 = vsub.f32 %v674, %v690
        %v707 = vadd.f32 %v691, 1e-05
        %v708 = vadd.f32 %v692, 1e-05
        %v709 = vadd.f32 %v693, 1e-05
        %v710 = vadd.f32 %v694, 1e-05
        %v711 = vadd.f32 %v695, 1e-05
        %v712 = vadd.f32 %v696, 1e-05
        %v713 = vadd.f32 %v697, 1e-05
        %v714 = vadd.f32 %v698, 1e-05
        %v715 = vadd.f32 %v699, 1e-05
        %v716 = vadd.f32 %v700, 1e-05
        %v717 = vadd.f32 %v701, 1e-05
        %v718 = vadd.f32 %v702, 1e-05
        %v719 = vadd.f32 %v703, 1e-05
        %v720 = vadd.f32 %v704, 1e-05
        %v721 = vadd.f32 %v705, 1e-05
        %v722 = vadd.f32 %v706, 1e-05
        %v723 = vrsqrt.pop %v707
        %v724 = vrsqrt.pop %v708
        %v725 = vrsqrt.pop %v709
        %v726 = vrsqrt.pop %v710
        %v727 = vrsqrt.pop %v711
        %v728 = vrsqrt.pop %v712
        %v729 = vrsqrt.pop %v713
        %v730 = vrsqrt.pop %v714
        %v731 = vrsqrt.pop %v715
        %v732 = vrsqrt.pop %v716
        %v733 = vrsqrt.pop %v717
        %v734 = vrsqrt.pop %v718
        %v735 = vrsqrt.pop %v719
        %v736 = vrsqrt.pop %v720
        %v737 = vrsqrt.pop %v721
        %v738 = vrsqrt.pop %v722
        %v739 = vsub.f32 %v501, %v643
        %v740 = vsub.f32 %v504, %v644
        %v741 = vsub.f32 %v509, %v645
        %v742 = vsub.f32 %v512, %v646
        %v743 = vsub.f32 %v517, %v647
        %v744 = vsub.f32 %v520, %v648
        %v745 = vsub.f32 %v525, %v649
        %v746 = vsub.f32 %v528, %v650
        %v747 = vsub.f32 %v533, %v651
        %v748 = vsub.f32 %v536, %v652
        %v749 = vsub.f32 %v541, %v653
        %v750 = vsub.f32 %v544, %v654
        %v751 = vsub.f32 %v549, %v655
        %v752 = vsub.f32 %v552, %v656
        %v753 = vsub.f32 %v557, %v657
        %v754 = vsub.f32 %v560, %v658
        %v755 = vmul.f32 %v739, %v723
        %v756 = vmul.f32 %v740, %v724
        %v757 = vmul.f32 %v741, %v725
        %v758 = vmul.f32 %v742, %v726
        %v759 = vmul.f32 %v743, %v727
        %v760 = vmul.f32 %v744, %v728
        %v761 = vmul.f32 %v745, %v729
        %v762 = vmul.f32 %v746, %v730
        %v763 = vmul.f32 %v747, %v731
        %v764 = vmul.f32 %v748, %v732
        %v765 = vmul.f32 %v749, %v733
        %v766 = vmul.f32 %v750, %v734
        %v767 = vmul.f32 %v751, %v735
        %v768 = vmul.f32 %v752, %v736
        %v769 = vmul.f32 %v753, %v737
        %v770 = vmul.f32 %v754, %v738
        %v772 = vlaneseq
        %v773 = vshrl.u32 %v772, 7
        %v774 = vsub.s32 0, %v773
        %v775 = vrot.slane %v329, %v774
        %v777 = vmul.f32 %v755, %v775
        %v778 = vmul.f32 %v756, %v775
        %v779 = vmul.f32 %v757, %v775
        %v780 = vmul.f32 %v758, %v775
        %v781 = vmul.f32 %v759, %v775
        %v782 = vmul.f32 %v760, %v775
        %v783 = vmul.f32 %v761, %v775
        %v784 = vmul.f32 %v762, %v775
        %v785 = vmul.f32 %v763, %v775
        %v786 = vmul.f32 %v764, %v775
        %v787 = vmul.f32 %v765, %v775
        %v788 = vmul.f32 %v766, %v775
        %v789 = vmul.f32 %v767, %v775
        %v790 = vmul.f32 %v768, %v775
        %v791 = vmul.f32 %v769, %v775
        %v792 = vmul.f32 %v770, %v775
        %v794 = vlaneseq
        %v795 = vshrl.u32 %v794, 7
        %v796 = vsub.s32 0, %v795
        %v797 = vrot.slane %v330, %v796
        %v799 = vadd.f32 %v777, %v797
        %v800 = vadd.f32 %v778, %v797
        %v801 = vadd.f32 %v779, %v797
        %v802 = vadd.f32 %v780, %v797
        %v803 = vadd.f32 %v781, %v797
        %v804 = vadd.f32 %v782, %v797
        %v805 = vadd.f32 %v783, %v797
        %v806 = vadd.f32 %v784, %v797
        %v807 = vadd.f32 %v785, %v797
        %v808 = vadd.f32 %v786, %v797
        %v809 = vadd.f32 %v787, %v797
        %v810 = vadd.f32 %v788, %v797
        %v811 = vadd.f32 %v789, %v797
        %v812 = vadd.f32 %v790, %v797
        %v813 = vadd.f32 %v791, %v797
        %v814 = vadd.f32 %v792, %v797
        %v815 = vmax.f32 %v799, 0.0
        %v816 = vmax.f32 %v800, 0.0
        %v817 = vmax.f32 %v801, 0.0
        %v818 = vmax.f32 %v802, 0.0
        %v819 = vmax.f32 %v803, 0.0
        %v820 = vmax.f32 %v804, 0.0
        %v821 = vmax.f32 %v805, 0.0
        %v822 = vmax.f32 %v806, 0.0
        %v823 = vmax.f32 %v807, 0.0
        %v824 = vmax.f32 %v808, 0.0
        %v825 = vmax.f32 %v809, 0.0
        %v826 = vmax.f32 %v810, 0.0
        %v827 = vmax.f32 %v811, 0.0
        %v828 = vmax.f32 %v812, 0.0
        %v829 = vmax.f32 %v813, 0.0
        %v830 = vmax.f32 %v814, 0.0
        %v831 = vpack.c.bf16 %v816, %v815
        %v832 = vpack.c.bf16 %v818, %v817
        %v833 = vpack.c.bf16 %v820, %v819
        %v834 = vpack.c.bf16 %v822, %v821
        %v835 = vpack.c.bf16 %v824, %v823
        %v836 = vpack.c.bf16 %v826, %v825
        %v837 = vpack.c.bf16 %v828, %v827
        %v838 = vpack.c.bf16 %v830, %v829
        %v839 = vld [vmem:[#allocation7] sm:$0xf]
        %v840 = vld [vmem:[#allocation7 + $0x4] sm:$0xf]
        %v841 = vld [vmem:[#allocation7 + $0x8] sm:$0xf]
        %v842 = vld [vmem:[#allocation7 + $0xc] sm:$0xf]
        %v843 = vld [vmem:[#allocation7 + $0x10] sm:$0xf]
        %v844 = vld [vmem:[#allocation7 + $0x14] sm:$0xf]
        %v845 = vld [vmem:[#allocation7 + $0x18] sm:$0xf]
        %v846 = vld [vmem:[#allocation7 + $0x1c] sm:$0xf]
        %v847 = vld [vmem:[#allocation7 + $0x20] sm:$0xf]
        %v848 = vld [vmem:[#allocation7 + $0x24] sm:$0xf]
        %v849 = vld [vmem:[#allocation7 + $0x28] sm:$0xf]
        %v850 = vld [vmem:[#allocation7 + $0x2c] sm:$0xf]
        %v851 = vld [vmem:[#allocation7 + $0x30] sm:$0xf]
        %v852 = vld [vmem:[#allocation7 + $0x34] sm:$0xf]
        %v853 = vld [vmem:[#allocation7 + $0x38] sm:$0xf]
        %v854 = vld [vmem:[#allocation7 + $0x3c] sm:$0xf]
        %v855 = vld [vmem:[%s6] sm:$0x1]
        %v857 = vlaneseq
        %v858 = vshrl.u32 %v857, 7
        %v859 = vsub.s32 0, %v858
        %v860 = vrot.slane %v855, %v859
        %v878 = vunpack.c.l.b16 %v839
        %v879 = vunpack.c.l.b16 %v840
        %v880 = vunpack.c.l.b16 %v841
        %v881 = vunpack.c.l.b16 %v842
        %v882 = vunpack.c.l.b16 %v843
        %v883 = vunpack.c.l.b16 %v844
        %v884 = vunpack.c.l.b16 %v845
        %v885 = vunpack.c.l.b16 %v846
        %v886 = vunpack.c.l.b16 %v847
        %v887 = vunpack.c.l.b16 %v848
        %v888 = vunpack.c.l.b16 %v849
        %v889 = vunpack.c.l.b16 %v850
        %v890 = vunpack.c.l.b16 %v851
        %v891 = vunpack.c.l.b16 %v852
        %v892 = vunpack.c.l.b16 %v853
        %v893 = vunpack.c.l.b16 %v854
        %v894 = vpack.c.b16 %v879, %v878
        %v895 = vpack.c.b16 %v881, %v880
        %v896 = vpack.c.b16 %v883, %v882
        %v897 = vpack.c.b16 %v885, %v884
        %v898 = vpack.c.b16 %v887, %v886
        %v899 = vpack.c.b16 %v889, %v888
        %v900 = vpack.c.b16 %v891, %v890
        %v901 = vpack.c.b16 %v893, %v892
        %910 = vmatprep.subr.bf16.mxu0 0
        %911 = vmatpush1.bf16.msra.mxu0 %v901
        %912 = vmatprep.subr.bf16.mxu0 0
        %913 = vmatpush1.bf16.msra.mxu0 %v900
        %914 = vmatprep.subr.bf16.mxu0 0
        %915 = vmatpush1.bf16.msra.mxu0 %v899
        %916 = vmatprep.subr.bf16.mxu0 0
        %917 = vmatpush1.bf16.msra.mxu0 %v898
        %918 = vmatprep.subr.bf16.mxu0 0
        %919 = vmatpush1.bf16.msra.mxu0 %v897
        %920 = vmatprep.subr.bf16.mxu0 0
        %921 = vmatpush1.bf16.msra.mxu0 %v896
        %922 = vmatprep.subr.bf16.mxu0 0
        %923 = vmatpush1.bf16.msra.mxu0 %v895
        %924 = vmatprep.subr.bf16.mxu0 0
        %925 = vmatpush1.bf16.msra.mxu0 %v894
        %926 = vmatprep.subr.bf16.mxu0 0
        %927 = vmatpush2.bf16.msra.mxu0 0
        %928 = vmatprep.subr.bf16.mxu0 0
        %929 = vmatpush2.bf16.msra.mxu0 0
        %930 = vmatprep.subr.bf16.mxu0 0
        %931 = vmatpush2.bf16.msra.mxu0 0
        %932 = vmatprep.subr.bf16.mxu0 0
        %933 = vmatpush2.bf16.msra.mxu0 0
        %934 = vmatprep.subr.bf16.mxu0 0
        %935 = vmatpush2.bf16.msra.mxu0 0
        %936 = vmatprep.subr.bf16.mxu0 0
        %937 = vmatpush2.bf16.msra.mxu0 0
        %938 = vmatprep.subr.bf16.mxu0 0
        %939 = vmatpush2.bf16.msra.mxu0 0
        %940 = vmatprep.subr.bf16.mxu0 0
        %941 = vmatpush2.bf16.msra.mxu0 0
        %942 = vmatprep.mubr.bf16.mxu0 0
        %943 = vmatmul.mubr.bf16.gmra.mxu0 %v831
        %v944 = vpop.f32.mrf.mxu0
        %v945 = vadd.f32 %v860, %v944
        %v946 = vpop.f32.mrf.mxu0
        %v947 = vpop.f32.mrf.mxu0
        %v948 = vadd.f32 %v860, %v947
        %v949 = vpop.f32.mrf.mxu0
        %950 = vmatprep.mubr.bf16.mxu0 0
        %951 = vmatmul.mubr.bf16.gmra.mxu0 %v832
        %v952 = vpop.f32.mrf.mxu0
        %v953 = vadd.f32 %v860, %v952
        %v954 = vpop.f32.mrf.mxu0
        %v955 = vpop.f32.mrf.mxu0
        %v956 = vadd.f32 %v860, %v955
        %v957 = vpop.f32.mrf.mxu0
        %958 = vmatprep.mubr.bf16.mxu0 0
        %959 = vmatmul.mubr.bf16.gmra.mxu0 %v833
        %v960 = vpop.f32.mrf.mxu0
        %v961 = vadd.f32 %v860, %v960
        %v962 = vpop.f32.mrf.mxu0
        %v963 = vpop.f32.mrf.mxu0
        %v964 = vadd.f32 %v860, %v963
        %v965 = vpop.f32.mrf.mxu0
        %966 = vmatprep.mubr.bf16.mxu0 0
        %967 = vmatmul.mubr.bf16.gmra.mxu0 %v834
        %v968 = vpop.f32.mrf.mxu0
        %v969 = vadd.f32 %v860, %v968
        %v970 = vpop.f32.mrf.mxu0
        %v971 = vpop.f32.mrf.mxu0
        %v972 = vadd.f32 %v860, %v971
        %v973 = vpop.f32.mrf.mxu0
        %974 = vmatprep.mubr.bf16.mxu0 0
        %975 = vmatmul.mubr.bf16.gmra.mxu0 %v835
        %v976 = vpop.f32.mrf.mxu0
        %v977 = vadd.f32 %v860, %v976
        %v978 = vpop.f32.mrf.mxu0
        %v979 = vpop.f32.mrf.mxu0
        %v980 = vadd.f32 %v860, %v979
        %v981 = vpop.f32.mrf.mxu0
        %982 = vmatprep.mubr.bf16.mxu0 0
        %983 = vmatmul.mubr.bf16.gmra.mxu0 %v836
        %v984 = vpop.f32.mrf.mxu0
        %v985 = vadd.f32 %v860, %v984
        %v986 = vpop.f32.mrf.mxu0
        %v987 = vpop.f32.mrf.mxu0
        %v988 = vadd.f32 %v860, %v987
        %v989 = vpop.f32.mrf.mxu0
        %990 = vmatprep.mubr.bf16.mxu0 0
        %991 = vmatmul.mubr.bf16.gmra.mxu0 %v837
        %v992 = vpop.f32.mrf.mxu0
        %v993 = vadd.f32 %v860, %v992
        %v994 = vpop.f32.mrf.mxu0
        %v995 = vpop.f32.mrf.mxu0
        %v996 = vadd.f32 %v860, %v995
        %v997 = vpop.f32.mrf.mxu0
        %998 = vmatprep.mubr.bf16.mxu0 0
        %999 = vmatmul.mubr.bf16.gmra.mxu0 %v838
        %v1000 = vpop.f32.mrf.mxu0
        %v1001 = vadd.f32 %v860, %v1000
        %v1002 = vpop.f32.mrf.mxu0
        %v1003 = vpop.f32.mrf.mxu0
        %v1004 = vadd.f32 %v860, %v1003
        %v1005 = vpop.f32.mrf.mxu0
        %1006 = vdwg.mxu0
        %1007 = vadd.xlane.f32.xlu0 %v945
        %v1008 = vpop.xlane.xlu0 %1007
        %1009 = vadd.xlane.f32.xlu0 %v948
        %v1010 = vpop.xlane.xlu0 %1009
        %1011 = vadd.xlane.f32.xlu0 %v953
        %v1012 = vpop.xlane.xlu0 %1011
        %1013 = vadd.xlane.f32.xlu0 %v956
        %v1014 = vpop.xlane.xlu0 %1013
        %1015 = vadd.xlane.f32.xlu0 %v961
        %v1016 = vpop.xlane.xlu0 %1015
        %1017 = vadd.xlane.f32.xlu0 %v964
        %v1018 = vpop.xlane.xlu0 %1017
        %1019 = vadd.xlane.f32.xlu0 %v969
        %v1020 = vpop.xlane.xlu0 %1019
        %1021 = vadd.xlane.f32.xlu0 %v972
        %v1022 = vpop.xlane.xlu0 %1021
        %1023 = vadd.xlane.f32.xlu0 %v977
        %v1024 = vpop.xlane.xlu0 %1023
        %1025 = vadd.xlane.f32.xlu0 %v980
        %v1026 = vpop.xlane.xlu0 %1025
        %1027 = vadd.xlane.f32.xlu0 %v985
        %v1028 = vpop.xlane.xlu0 %1027
        %1029 = vadd.xlane.f32.xlu0 %v988
        %v1030 = vpop.xlane.xlu0 %1029
        %1031 = vadd.xlane.f32.xlu0 %v993
        %v1032 = vpop.xlane.xlu0 %1031
        %1033 = vadd.xlane.f32.xlu0 %v996
        %v1034 = vpop.xlane.xlu0 %1033
        %1035 = vadd.xlane.f32.xlu0 %v1001
        %v1036 = vpop.xlane.xlu0 %1035
        %1037 = vadd.xlane.f32.xlu0 %v1004
        %v1038 = vpop.xlane.xlu0 %1037
        %v1039 = vmul.f32 %v945, %v945
        %v1040 = vmul.f32 %v948, %v948
        %v1041 = vmul.f32 %v953, %v953
        %v1042 = vmul.f32 %v956, %v956
        %v1043 = vmul.f32 %v961, %v961
        %v1044 = vmul.f32 %v964, %v964
        %v1045 = vmul.f32 %v969, %v969
        %v1046 = vmul.f32 %v972, %v972
        %v1047 = vmul.f32 %v977, %v977
        %v1048 = vmul.f32 %v980, %v980
        %v1049 = vmul.f32 %v985, %v985
        %v1050 = vmul.f32 %v988, %v988
        %v1051 = vmul.f32 %v993, %v993
        %v1052 = vmul.f32 %v996, %v996
        %v1053 = vmul.f32 %v1001, %v1001
        %v1054 = vmul.f32 %v1004, %v1004
        %1055 = vadd.xlane.f32.xlu0 %v1039
        %v1056 = vpop.xlane.xlu0 %1055
        %1057 = vadd.xlane.f32.xlu0 %v1040
        %v1058 = vpop.xlane.xlu0 %1057
        %1059 = vadd.xlane.f32.xlu0 %v1041
        %v1060 = vpop.xlane.xlu0 %1059
        %1061 = vadd.xlane.f32.xlu0 %v1042
        %v1062 = vpop.xlane.xlu0 %1061
        %1063 = vadd.xlane.f32.xlu0 %v1043
        %v1064 = vpop.xlane.xlu0 %1063
        %1065 = vadd.xlane.f32.xlu0 %v1044
        %v1066 = vpop.xlane.xlu0 %1065
        %1067 = vadd.xlane.f32.xlu0 %v1045
        %v1068 = vpop.xlane.xlu0 %1067
        %1069 = vadd.xlane.f32.xlu0 %v1046
        %v1070 = vpop.xlane.xlu0 %1069
        %1071 = vadd.xlane.f32.xlu0 %v1047
        %v1072 = vpop.xlane.xlu0 %1071
        %1073 = vadd.xlane.f32.xlu0 %v1048
        %v1074 = vpop.xlane.xlu0 %1073
        %1075 = vadd.xlane.f32.xlu0 %v1049
        %v1076 = vpop.xlane.xlu0 %1075
        %1077 = vadd.xlane.f32.xlu0 %v1050
        %v1078 = vpop.xlane.xlu0 %1077
        %1079 = vadd.xlane.f32.xlu0 %v1051
        %v1080 = vpop.xlane.xlu0 %1079
        %1081 = vadd.xlane.f32.xlu0 %v1052
        %v1082 = vpop.xlane.xlu0 %1081
        %1083 = vadd.xlane.f32.xlu0 %v1053
        %v1084 = vpop.xlane.xlu0 %1083
        %1085 = vadd.xlane.f32.xlu0 %v1054
        %v1086 = vpop.xlane.xlu0 %1085
        %v1087 = vmul.f32 %v1008, 0.03125
        %v1088 = vmul.f32 %v1010, 0.03125
        %v1089 = vmul.f32 %v1012, 0.03125
        %v1090 = vmul.f32 %v1014, 0.03125
        %v1091 = vmul.f32 %v1016, 0.03125
        %v1092 = vmul.f32 %v1018, 0.03125
        %v1093 = vmul.f32 %v1020, 0.03125
        %v1094 = vmul.f32 %v1022, 0.03125
        %v1095 = vmul.f32 %v1024, 0.03125
        %v1096 = vmul.f32 %v1026, 0.03125
        %v1097 = vmul.f32 %v1028, 0.03125
        %v1098 = vmul.f32 %v1030, 0.03125
        %v1099 = vmul.f32 %v1032, 0.03125
        %v1100 = vmul.f32 %v1034, 0.03125
        %v1101 = vmul.f32 %v1036, 0.03125
        %v1102 = vmul.f32 %v1038, 0.03125
        %v1103 = vmul.f32 %v1056, 0.03125
        %v1104 = vmul.f32 %v1058, 0.03125
        %v1105 = vmul.f32 %v1060, 0.03125
        %v1106 = vmul.f32 %v1062, 0.03125
        %v1107 = vmul.f32 %v1064, 0.03125
        %v1108 = vmul.f32 %v1066, 0.03125
        %v1109 = vmul.f32 %v1068, 0.03125
        %v1110 = vmul.f32 %v1070, 0.03125
        %v1111 = vmul.f32 %v1072, 0.03125
        %v1112 = vmul.f32 %v1074, 0.03125
        %v1113 = vmul.f32 %v1076, 0.03125
        %v1114 = vmul.f32 %v1078, 0.03125
        %v1115 = vmul.f32 %v1080, 0.03125
        %v1116 = vmul.f32 %v1082, 0.03125
        %v1117 = vmul.f32 %v1084, 0.03125
        %v1118 = vmul.f32 %v1086, 0.03125
        %v1119 = vmul.f32 %v1087, %v1087
        %v1120 = vmul.f32 %v1088, %v1088
        %v1121 = vmul.f32 %v1089, %v1089
        %v1122 = vmul.f32 %v1090, %v1090
        %v1123 = vmul.f32 %v1091, %v1091
        %v1124 = vmul.f32 %v1092, %v1092
        %v1125 = vmul.f32 %v1093, %v1093
        %v1126 = vmul.f32 %v1094, %v1094
        %v1127 = vmul.f32 %v1095, %v1095
        %v1128 = vmul.f32 %v1096, %v1096
        %v1129 = vmul.f32 %v1097, %v1097
        %v1130 = vmul.f32 %v1098, %v1098
        %v1131 = vmul.f32 %v1099, %v1099
        %v1132 = vmul.f32 %v1100, %v1100
        %v1133 = vmul.f32 %v1101, %v1101
        %v1134 = vmul.f32 %v1102, %v1102
        %v1135 = vsub.f32 %v1103, %v1119
        %v1136 = vsub.f32 %v1104, %v1120
        %v1137 = vsub.f32 %v1105, %v1121
        %v1138 = vsub.f32 %v1106, %v1122
        %v1139 = vsub.f32 %v1107, %v1123
        %v1140 = vsub.f32 %v1108, %v1124
        %v1141 = vsub.f32 %v1109, %v1125
        %v1142 = vsub.f32 %v1110, %v1126
        %v1143 = vsub.f32 %v1111, %v1127
        %v1144 = vsub.f32 %v1112, %v1128
        %v1145 = vsub.f32 %v1113, %v1129
        %v1146 = vsub.f32 %v1114, %v1130
        %v1147 = vsub.f32 %v1115, %v1131
        %v1148 = vsub.f32 %v1116, %v1132
        %v1149 = vsub.f32 %v1117, %v1133
        %v1150 = vsub.f32 %v1118, %v1134
        %v1151 = vadd.f32 %v1135, 1e-05
        %v1152 = vadd.f32 %v1136, 1e-05
        %v1153 = vadd.f32 %v1137, 1e-05
        %v1154 = vadd.f32 %v1138, 1e-05
        %v1155 = vadd.f32 %v1139, 1e-05
        %v1156 = vadd.f32 %v1140, 1e-05
        %v1157 = vadd.f32 %v1141, 1e-05
        %v1158 = vadd.f32 %v1142, 1e-05
        %v1159 = vadd.f32 %v1143, 1e-05
        %v1160 = vadd.f32 %v1144, 1e-05
        %v1161 = vadd.f32 %v1145, 1e-05
        %v1162 = vadd.f32 %v1146, 1e-05
        %v1163 = vadd.f32 %v1147, 1e-05
        %v1164 = vadd.f32 %v1148, 1e-05
        %v1165 = vadd.f32 %v1149, 1e-05
        %v1166 = vadd.f32 %v1150, 1e-05
        %v1167 = vrsqrt.pop %v1151
        %v1168 = vrsqrt.pop %v1152
        %v1169 = vrsqrt.pop %v1153
        %v1170 = vrsqrt.pop %v1154
        %v1171 = vrsqrt.pop %v1155
        %v1172 = vrsqrt.pop %v1156
        %v1173 = vrsqrt.pop %v1157
        %v1174 = vrsqrt.pop %v1158
        %v1175 = vrsqrt.pop %v1159
        %v1176 = vrsqrt.pop %v1160
        %v1177 = vrsqrt.pop %v1161
        %v1178 = vrsqrt.pop %v1162
        %v1179 = vrsqrt.pop %v1163
        %v1180 = vrsqrt.pop %v1164
        %v1181 = vrsqrt.pop %v1165
        %v1182 = vrsqrt.pop %v1166
        %v1183 = vsub.f32 %v945, %v1087
        %v1184 = vsub.f32 %v948, %v1088
        %v1185 = vsub.f32 %v953, %v1089
        %v1186 = vsub.f32 %v956, %v1090
        %v1187 = vsub.f32 %v961, %v1091
        %v1188 = vsub.f32 %v964, %v1092
        %v1189 = vsub.f32 %v969, %v1093
        %v1190 = vsub.f32 %v972, %v1094
        %v1191 = vsub.f32 %v977, %v1095
        %v1192 = vsub.f32 %v980, %v1096
        %v1193 = vsub.f32 %v985, %v1097
        %v1194 = vsub.f32 %v988, %v1098
        %v1195 = vsub.f32 %v993, %v1099
        %v1196 = vsub.f32 %v996, %v1100
        %v1197 = vsub.f32 %v1001, %v1101
        %v1198 = vsub.f32 %v1004, %v1102
        %v1199 = vmul.f32 %v1183, %v1167
        %v1200 = vmul.f32 %v1184, %v1168
        %v1201 = vmul.f32 %v1185, %v1169
        %v1202 = vmul.f32 %v1186, %v1170
        %v1203 = vmul.f32 %v1187, %v1171
        %v1204 = vmul.f32 %v1188, %v1172
        %v1205 = vmul.f32 %v1189, %v1173
        %v1206 = vmul.f32 %v1190, %v1174
        %v1207 = vmul.f32 %v1191, %v1175
        %v1208 = vmul.f32 %v1192, %v1176
        %v1209 = vmul.f32 %v1193, %v1177
        %v1210 = vmul.f32 %v1194, %v1178
        %v1211 = vmul.f32 %v1195, %v1179
        %v1212 = vmul.f32 %v1196, %v1180
        %v1213 = vmul.f32 %v1197, %v1181
        %v1214 = vmul.f32 %v1198, %v1182
        %v1215 = vmul.f32 %v1199, %v775
        %v1216 = vmul.f32 %v1200, %v775
        %v1217 = vmul.f32 %v1201, %v775
        %v1218 = vmul.f32 %v1202, %v775
        %v1219 = vmul.f32 %v1203, %v775
        %v1220 = vmul.f32 %v1204, %v775
        %v1221 = vmul.f32 %v1205, %v775
        %v1222 = vmul.f32 %v1206, %v775
        %v1223 = vmul.f32 %v1207, %v775
        %v1224 = vmul.f32 %v1208, %v775
        %v1225 = vmul.f32 %v1209, %v775
        %v1226 = vmul.f32 %v1210, %v775
        %v1227 = vmul.f32 %v1211, %v775
        %v1228 = vmul.f32 %v1212, %v775
        %v1229 = vmul.f32 %v1213, %v775
        %v1230 = vmul.f32 %v1214, %v775
        %v1231 = vadd.f32 %v1215, %v797
        %v1232 = vadd.f32 %v1216, %v797
        %v1233 = vadd.f32 %v1217, %v797
        %v1234 = vadd.f32 %v1218, %v797
        %v1235 = vadd.f32 %v1219, %v797
        %v1236 = vadd.f32 %v1220, %v797
        %v1237 = vadd.f32 %v1221, %v797
        %v1238 = vadd.f32 %v1222, %v797
        %v1239 = vadd.f32 %v1223, %v797
        %v1240 = vadd.f32 %v1224, %v797
        %v1241 = vadd.f32 %v1225, %v797
        %v1242 = vadd.f32 %v1226, %v797
        %v1243 = vadd.f32 %v1227, %v797
        %v1244 = vadd.f32 %v1228, %v797
        %v1245 = vadd.f32 %v1229, %v797
        %v1246 = vadd.f32 %v1230, %v797
        %v1247 = vmax.f32 %v1231, 0.0
        %v1248 = vmax.f32 %v1232, 0.0
        %v1249 = vmax.f32 %v1233, 0.0
        %v1250 = vmax.f32 %v1234, 0.0
        %v1251 = vmax.f32 %v1235, 0.0
        %v1252 = vmax.f32 %v1236, 0.0
        %v1253 = vmax.f32 %v1237, 0.0
        %v1254 = vmax.f32 %v1238, 0.0
        %v1255 = vmax.f32 %v1239, 0.0
        %v1256 = vmax.f32 %v1240, 0.0
        %v1257 = vmax.f32 %v1241, 0.0
        %v1258 = vmax.f32 %v1242, 0.0
        %v1259 = vmax.f32 %v1243, 0.0
        %v1260 = vmax.f32 %v1244, 0.0
        %v1261 = vmax.f32 %v1245, 0.0
        %v1262 = vmax.f32 %v1246, 0.0
        %1263 = vst [vmem:[%s325] sm:$0xff] %v1247
        %1264 = vst [vmem:[%s325 + $0x8] sm:$0xff] %v1248
        %1265 = vst [vmem:[%s325 + $0x10] sm:$0xff] %v1249
        %1266 = vst [vmem:[%s325 + $0x18] sm:$0xff] %v1250
        %1267 = vst [vmem:[%s325 + $0x20] sm:$0xff] %v1251
        %1268 = vst [vmem:[%s325 + $0x28] sm:$0xff] %v1252
        %1269 = vst [vmem:[%s325 + $0x30] sm:$0xff] %v1253
        %1270 = vst [vmem:[%s325 + $0x38] sm:$0xff] %v1254
        %1271 = vst [vmem:[%s325 + $0x40] sm:$0xff] %v1255
        %1272 = vst [vmem:[%s325 + $0x48] sm:$0xff] %v1256
        %1273 = vst [vmem:[%s325 + $0x50] sm:$0xff] %v1257
        %1274 = vst [vmem:[%s325 + $0x58] sm:$0xff] %v1258
        %1275 = vst [vmem:[%s325 + $0x60] sm:$0xff] %v1259
        %1276 = vst [vmem:[%s325 + $0x68] sm:$0xff] %v1260
        %1277 = vst [vmem:[%s325 + $0x70] sm:$0xff] %v1261
        %1278 = vst [vmem:[%s325 + $0x78] sm:$0xff] %v1262
        %s1279 = sand.u32 %s185, 1
        %s1280 = scalar_lea.sflag [#allocation4], %s1279
        %s1281 = sand.u32 %s185, 1
        %s1282 = smul.addr %s1281, 128
        %s1283 = scalar_lea.vmem [#allocation8], %s1282
        // Predicated region
        $region61: #{tpu_custom_call.1} parent=47 // pred_check
          %p1284 = pneg %p195
        $region62: #{tpu_custom_call.1} parent=47 // pred_check_branch
          %1286 = sbr.rel (%p1284) target = $region64
        $region63: #{tpu_custom_call.1} parent=47 // pred_region
          %s1287 = smul.u32 16, %s25
          %s1289 = ssub.s32 2048, 2048
          %1290 = vsyncadd %s1280, %s1289
          %s1291 = smul.addr %s1287, 128
          %s1292 = scalar_lea.hbm %s7, %s1291
          %s1293 = sshll.u32 %s1283, 4
          %s1294 = int_to_ptr.vmem [resolvable:$true] %s1293
          %1299 = dma.vmem_to_hbm [thread:$0]  %s1294, 2048, %s1292, %s1280, 128, 128, 8
        $region64: #{tpu_custom_call.1} parent=47 // pred_fallthru
          _
      $region48: #{tpu_custom_call.1} parent=5 // pred_fallthru
        _
      %p1300 = scmp.le.s32.totalorder 2, %s20
      // Predicated region
      $region65: #{tpu_custom_call.1} parent=5 // pred_check
        %p1301 = pneg %p1300
      $region66: #{tpu_custom_call.1} parent=5 // pred_check_branch
        %1303 = sbr.rel (%p1301) target = $region68
      $region67: #{tpu_custom_call.1} parent=5 // pred_region
        %s1304 = ssub.s32 %s20, 2
        // Predicated region
        $region69: #{tpu_custom_call.1} parent=67 // pred_check
          %p1305 = pneg %p201
        $region70: #{tpu_custom_call.1} parent=67 // pred_check_branch
          %1307 = sbr.rel (%p1305) target = $region72
        $region71: #{tpu_custom_call.1} parent=67 // pred_region
          %s1308 = sand.u32 %s186, 1
          %s1309 = scalar_lea.sflag [#allocation4], %s1308
          %s1310 = sand.u32 %s186, 1
          %s1311 = smul.addr %s1310, 128
          %s1312 = scalar_lea.vmem [#allocation8], %s1311
          %1313 = dma.done %s1309, 2048
        $region72: #{tpu_custom_call.1} parent=67 // pred_fallthru
          _
      $region68: #{tpu_custom_call.1} parent=5 // pred_fallthru
        _
    $region6: #{tpu_custom_call.1} parent=1 // loop_footer
      %s24 = sadd.s32 1, %s20
    $region7: #{tpu_custom_call.1} parent=1 // loop_footer_branch
      %19 = sbr.rel target = $region3
    $region8: #{tpu_custom_call.1} parent=1 // loop_exit
      _
    %1314 = vsyncpa [#allocation3], 1
    %s1315 = scalar_lea.sflag [#allocation3], 1
    %1316 = vsyncpa %s1315, 1
    %1317 = vsyncpa [#allocation6], 1
    %1318 = vsyncpa [#allocation4], 1
    %s1319 = scalar_lea.sflag [#allocation4], 1
    %1320 = vsyncpa %s1319, 1

</llo_original>
